<compile_context>
chip_gen: v7x
topology: tpu7x:2x2x1
jax: 0.10.0
libtpu: 0.0.40
codegen_flags: <defaults>
</compile_context>

<pallas_src>
import functools

import jax
import jax.numpy as jnp
from jax import lax
from jax.experimental import pallas as pl
from jax.experimental.pallas import tpu as pltpu

LANES = 128        # lane width (minor axis of every vreg)
CHUNK_ROWS = 256   # rows per in-kernel inner step (128 KiB f32 per input)


def _round_up(x, m):
    return ((x + m - 1) // m) * m


def _device_kind():
    try:
        return jax.devices()[0].device_kind.lower()
    except Exception:
        return ""


def _num_core_splits():
    """Size of the leading 'parallel' split axis.

    2 only on generations with more than one TensorCore behind one Pallas
    device (v4 / v5p megacore, v7x).  On single-TC chips (v5e, v6e) a split
    buys nothing and would only re-read one duplicated (masked) block.
    """
    kind = _device_kind()
    if not kind:
        return 1
    if "lite" in kind or "v5e" in kind or "v6" in kind:
        return 1
    if any(tag in kind for tag in ("v7", "v5p", "v4")):
        return 2
    return 1


def _vmem_budget():
    """(bytes per input per pipeline buffer, vmem_limit_bytes), per generation."""
    kind = _device_kind()
    cap = None
    try:
        cap = int(getattr(pltpu.get_tpu_info(), "vmem_capacity_bytes", 0)) or None
    except Exception:
        cap = None
    if "v7" in kind or cap is None or cap < 96 * 1024 * 1024:
        # v7x (64 MiB VMEM per TensorCore) or unknown -> conservative sizing:
        # 4 MiB/input/buffer => 16 MiB of double-buffered inputs + headroom.
        return 4 * 1024 * 1024, 40 * 1024 * 1024
    # v5e / v6e: 128 MiB physical VMEM -> 8 MiB/input/buffer (32 MiB inputs).
    return 8 * 1024 * 1024, 64 * 1024 * 1024


def _agree_loss_kernel(pos_ref, neg_ref, out_ref, acc_ref, *,
                       rows_total, tile_rows, chunk_rows, blocks_per_split):
    c = pl.program_id(0)          # core-split index ("parallel")
    i = pl.program_id(1)          # block index within this split ("arbitrary")

    @pl.when(i == 0)
    def _():
        acc_ref[...] = jnp.zeros_like(acc_ref)

    # Logical (unclamped) block handled by this step.  All index math is on
    # *rows* (= n_elements // 128), so int32 is safe for any realistic size.
    blk = c * blocks_per_split + i
    row0 = blk * tile_rows
    num_chunks = tile_rows // chunk_rows

    def chunk_partial(j, masked):
        r = pl.multiple_of(j * chunk_rows, 8)
        p = pos_ref[pl.ds(r, chunk_rows), :].astype(jnp.float32)
        q = neg_ref[pl.ds(r, chunk_rows), :].astype(jnp.float32)
        d = p - q - 1.0
        if masked:
            lr = lax.broadcasted_iota(jnp.int32, (chunk_rows, LANES), 0)
            d = jnp.where(row0 + r + lr < rows_total, d, 0.0)
        # (chunk_rows, 128) -> (8, 128): grouping rows by 8 matches the native
        # (8, 128) tiling, so the reshape is free and the reduce is per-vreg
        # VPU adds only.
        return jnp.sum((d * d).reshape(chunk_rows // 8, 8, LANES), axis=0)

    block_is_full = row0 + tile_rows <= rows_total

    # Hot path: fully in-bounds block -> no iota, no compare, no select.
    @pl.when(block_is_full)
    def _():
        acc_ref[...] += lax.fori_loop(
            0, num_chunks,
            lambda j, s: s + chunk_partial(j, masked=False),
            jnp.zeros((8, LANES), jnp.float32))

    # Tail path: at most one partially valid boundary block per split plus any
    # clamped duplicate block from the core split -> row-level mask.
    @pl.when(jnp.logical_not(block_is_full))
    def _():
        acc_ref[...] += lax.fori_loop(
            0, num_chunks,
            lambda j, s: s + chunk_partial(j, masked=True),
            jnp.zeros((8, LANES), jnp.float32))

    @pl.when(i == pl.num_programs(1) - 1)
    def _():
        # Lane-dense, (8, 128)-aligned unmasked store of this split's raw
        # partial; the final cross-lane reduce happens in the tiny wrapper
        # epilogue.
        out_ref[...] = acc_ref[...]


def agree_loss(pos_preds, neg_preds):
    """loss = mean((pos_preds - neg_preds - 1) ** 2) over all elements."""
    assert pos_preds.shape == neg_preds.shape
    n = int(pos_preds.size)
    assert n > 0

    pos = jnp.ravel(pos_preds)     # reshape of a contiguous array: free
    neg = jnp.ravel(neg_preds)

    rows = n // LANES
    rem = n % LANES

    if rows == 0:
        # Fewer than one 128-lane row: a kernel launch is not worth it.
        d = pos.astype(jnp.float32) - neg.astype(jnp.float32) - 1.0
        return jnp.sum(d * d) / n

    # Handle the <128-element ragged tail with a tiny plain-JAX sum instead of
    # jnp.pad-ing the whole tensor (which would re-read + re-write every
    # element of both inputs in HBM).
    if rem:
        cut = rows * LANES
        tp = lax.slice(pos, (cut,), (n,)).astype(jnp.float32)
        tn = lax.slice(neg, (cut,), (n,)).astype(jnp.float32)
        td = tp - tn - 1.0
        tail_sum = jnp.sum(td * td)
        # TODO(synk): the prefix slice below still copies the main part once;
        # a pl.ANY ref + one small manual tail DMA would make the rem != 0
        # path fully copy-free as well.
        pos = lax.slice(pos, (0,), (cut,))
        neg = lax.slice(neg, (0,), (cut,))
    else:
        tail_sum = jnp.float32(0.0)

    pos2d = pos.reshape(rows, LANES)   # free when n % 128 == 0
    neg2d = neg.reshape(rows, LANES)

    itemsize = max(jnp.dtype(pos2d.dtype).itemsize,
                   jnp.dtype(neg2d.dtype).itemsize)
    # Sublane multiple required by the narrowest input dtype (8 f32, 16 bf16).
    sub = max(8, 32 // min(jnp.dtype(pos2d.dtype).itemsize,
                           jnp.dtype(neg2d.dtype).itemsize))

    per_buf_bytes, vmem_limit = _vmem_budget()
    max_tile_rows = max(sub, (per_buf_bytes // (LANES * itemsize)) // sub * sub)
    tile_rows = min(max_tile_rows, _round_up(rows, sub))
    chunk_rows = CHUNK_ROWS if tile_rows % CHUNK_ROWS == 0 else tile_rows

    total_blocks = pl.cdiv(rows, tile_rows)
    num_splits = min(_num_core_splits(), total_blocks)
    blocks_per_split = pl.cdiv(total_blocks, num_splits)

    if num_splits == 1:
        def in_map(c, i):
            return (i, 0)
    else:
        def in_map(c, i):
            # Clamp so a duplicated trailing block's DMA never starts past the
            # array end; the in-kernel row mask zeroes its contribution.
            return (jnp.minimum(c * blocks_per_split + i, total_blocks - 1), 0)

    kernel = functools.partial(
        _agree_loss_kernel,
        rows_total=rows,
        tile_rows=tile_rows,
        chunk_rows=chunk_rows,
        blocks_per_split=blocks_per_split,
    )

    partials = pl.pallas_call(
        kernel,
        out_shape=jax.ShapeDtypeStruct((num_splits * 8, LANES), jnp.float32),
        grid_spec=pltpu.PrefetchScalarGridSpec(
            num_scalar_prefetch=0,
            grid=(num_splits, blocks_per_split),
            in_specs=[
                pl.BlockSpec((tile_rows, LANES), in_map),
                pl.BlockSpec((tile_rows, LANES), in_map),
            ],
            out_specs=pl.BlockSpec((8, LANES), lambda c, i: (c, 0)),
            scratch_shapes=[pltpu.VMEM((8, LANES), jnp.float32)],
        ),
        compiler_params=pltpu.CompilerParams(
            # "parallel" on the split axis shards it across TensorCores on
            # multi-TC generations (megacore / v7x); "arbitrary" marks the
            # sequential reduction axis.
            dimension_semantics=("parallel", "arbitrary"),
            vmem_limit_bytes=vmem_limit,
        ),
    )(pos2d, neg2d)

    return (jnp.sum(partials) + tail_sum) / n


if __name__ == "__main__":
    key = jax.random.PRNGKey(0)
    k1, k2, k3, k4 = jax.random.split(key, 4)

    # Small synthetic "prediction" tensors (batch of user/item scores).
    shape = (2, 4, 16, 16)
    pos_preds = jax.random.normal(k1, shape, dtype=jnp.float32)
    neg_preds = jax.random.normal(k2, shape, dtype=jnp.float32)

    loss = agree_loss(pos_preds, neg_preds)
    jax.block_until_ready(loss)
    ref = jnp.mean((pos_preds - neg_preds - 1.0) ** 2)
    assert jnp.allclose(loss, ref, rtol=1e-5, atol=1e-5), (loss, ref)

    # Exercise the non-multiple-of-128 (masked boundary block + ragged tail) path.
    p2 = jax.random.normal(k3, (1337,), dtype=jnp.float32)
    n2 = jax.random.normal(k4, (1337,), dtype=jnp.float32)
    loss2 = agree_loss(p2, n2)
    jax.block_until_ready(loss2)
    ref2 = jnp.mean((p2 - n2 - 1.0) ** 2)
    assert jnp.allclose(loss2, ref2, rtol=1e-5, atol=1e-5), (loss2, ref2)

    print("KERNEL_OK")
</pallas_src>

<mosaic_0001>
module attributes {stable_mosaic.version = 11 : i64} {
  func.func @_agree_loss_kernel(%arg0: i32, %arg1: i32, %arg2: memref<16x128xf32, #tpu.memory_space<vmem>>, %arg3: memref<16x128xf32, #tpu.memory_space<vmem>>, %arg4: memref<8x128xf32, #tpu.memory_space<vmem>>, %arg5: memref<8x128xf32, #tpu.memory_space<vmem>>) attributes {dimension_semantics = [#tpu.dimension_semantics<parallel>, #tpu.dimension_semantics<arbitrary>], iteration_bounds = array<i64: 1, 1>, scalar_prefetch = 0 : i64, scratch_operands = 1 : i64, tpu.core_type = #tpu.core_type<tc>, window_params = [{transform_indices = @transform_0, window_bounds = array<i64: 16, 128>}, {transform_indices = @transform_1, window_bounds = array<i64: 16, 128>}, {transform_indices = @transform_2, window_bounds = array<i64: 8, 128>}]} {
    %c0_i32 = arith.constant 0 : i32
    %0 = arith.cmpi eq, %arg1, %c0_i32 : i32
    %1 = arith.extui %0 : i1 to i32
    %c0_i32_0 = arith.constant 0 : i32
    %2 = arith.cmpi ne, %1, %c0_i32_0 : i32
    scf.if %2 {
      %cst = arith.constant 0.000000e+00 : f32
      %16 = vector.broadcast %cst : f32 to vector<8x128xf32>
      %c0 = arith.constant 0 : index
      %c0_7 = arith.constant 0 : index
      %17 = vector.load %arg5[%c0, %c0_7] : memref<8x128xf32, #tpu.memory_space<vmem>>, vector<8x128xf32>
      tpu.vector_store %arg5[%c0, %c0_7], %16 {strides = array<i32>} : memref<8x128xf32, #tpu.memory_space<vmem>>, vector<8x128xf32>,
    } else {
    }
    %c1_i32 = arith.constant 1 : i32
    %3 = arith.muli %arg0, %c1_i32 : i32
    %4 = arith.addi %3, %arg1 : i32
    %c16_i32 = arith.constant 16 : i32
    %5 = arith.muli %4, %c16_i32 : i32
    %c16_i32_1 = arith.constant 16 : i32
    %6 = arith.addi %5, %c16_i32_1 : i32
    %c16_i32_2 = arith.constant 16 : i32
    %7 = arith.cmpi sle, %6, %c16_i32_2 : i32
    %8 = arith.extui %7 : i1 to i32
    %c0_i32_3 = arith.constant 0 : i32
    %9 = arith.cmpi ne, %8, %c0_i32_3 : i32
    scf.if %9 {
      %c0 = arith.constant 0 : index
      %c0_7 = arith.constant 0 : index
      %16 = vector.load %arg5[%c0, %c0_7] : memref<8x128xf32, #tpu.memory_space<vmem>>, vector<8x128xf32>
      %cst = arith.constant 0.000000e+00 : f32
      %17 = vector.broadcast %cst : f32 to vector<8x128xf32>
      %c0_i32_8 = arith.constant 0 : i32
      %c16_i32_9 = arith.constant 16 : i32
      %18 = arith.muli %c0_i32_8, %c16_i32_9 : i32
      %19 = tpu.assume_multiple %18, 8 : i32
      %20 = arith.index_cast %19 : i32 to index
      %c0_10 = arith.constant 0 : index
      %21 = vector.load %arg2[%20, %c0_10] : memref<16x128xf32, #tpu.memory_space<vmem>>, vector<16x128xf32>
      %22 = arith.index_cast %19 : i32 to index
      %c0_11 = arith.constant 0 : index
      %23 = vector.load %arg3[%22, %c0_11] : memref<16x128xf32, #tpu.memory_space<vmem>>, vector<16x128xf32>
      %24 = arith.subf %21, %23 : vector<16x128xf32>
      %cst_12 = arith.constant 1.000000e+00 : f32
      %25 = vector.broadcast %cst_12 : f32 to vector<16x128xf32>
      %26 = arith.subf %24, %25 : vector<16x128xf32>
      %27 = arith.mulf %26, %26 : vector<16x128xf32>
      %28 = vector.shape_cast %27 : vector<16x128xf32> to vector<2x8x128xf32>
      %cst_13 = arith.constant dense<0.000000e+00> : vector<8x128xf32>
      %29 = vector.multi_reduction <add>, %28, %cst_13 [0] : vector<2x8x128xf32> to vector<8x128xf32>
      %30 = arith.addf %17, %29 : vector<8x128xf32>
      %c1_i32_14 = arith.constant 1 : i32
      %31 = arith.addf %16, %30 : vector<8x128xf32>
      %c0_15 = arith.constant 0 : index
      %c0_16 = arith.constant 0 : index
      %32 = vector.load %arg5[%c0_15, %c0_16] : memref<8x128xf32, #tpu.memory_space<vmem>>, vector<8x128xf32>
      tpu.vector_store %arg5[%c0_15, %c0_16], %31 {strides = array<i32>} : memref<8x128xf32, #tpu.memory_space<vmem>>, vector<8x128xf32>,
    } else {
    }
    %true = arith.constant true
    %10 = arith.xori %7, %true : i1
    %11 = arith.extui %10 : i1 to i32
    %c0_i32_4 = arith.constant 0 : i32
    %12 = arith.cmpi ne, %11, %c0_i32_4 : i32
    scf.if %12 {
      %c0 = arith.constant 0 : index
      %c0_7 = arith.constant 0 : index
      %16 = vector.load %arg5[%c0, %c0_7] : memref<8x128xf32, #tpu.memory_space<vmem>>, vector<8x128xf32>
      %cst = arith.constant 0.000000e+00 : f32
      %17 = vector.broadcast %cst : f32 to vector<8x128xf32>
      %c0_i32_8 = arith.constant 0 : i32
      %c16_i32_9 = arith.constant 16 : i32
      %18 = arith.muli %c0_i32_8, %c16_i32_9 : i32
      %19 = tpu.assume_multiple %18, 8 : i32
      %20 = arith.index_cast %19 : i32 to index
      %c0_10 = arith.constant 0 : index
      %21 = vector.load %arg2[%20, %c0_10] : memref<16x128xf32, #tpu.memory_space<vmem>>, vector<16x128xf32>
      %22 = arith.index_cast %19 : i32 to index
      %c0_11 = arith.constant 0 : index
      %23 = vector.load %arg3[%22, %c0_11] : memref<16x128xf32, #tpu.memory_space<vmem>>, vector<16x128xf32>
      %24 = arith.subf %21, %23 : vector<16x128xf32>
      %cst_12 = arith.constant 1.000000e+00 : f32
      %25 = vector.broadcast %cst_12 : f32 to vector<16x128xf32>
      %26 = arith.subf %24, %25 : vector<16x128xf32>
      %27 = tpu.iota {dimensions = array<i32: 0>} : vector<16x128xi32>
      %28 = arith.addi %5, %19 : i32
      %29 = vector.broadcast %28 : i32 to vector<16x128xi32>
      %30 = arith.addi %29, %27 : vector<16x128xi32>
      %c16_i32_13 = arith.constant 16 : i32
      %31 = vector.broadcast %c16_i32_13 : i32 to vector<16x128xi32>
      %32 = arith.cmpi slt, %30, %31 : vector<16x128xi32>
      %cst_14 = arith.constant 0.000000e+00 : f32
      %33 = vector.broadcast %cst_14 : f32 to vector<16x128xf32>
      %34 = arith.select %32, %26, %33 : vector<16x128xi1>, vector<16x128xf32>
      %35 = arith.mulf %34, %34 : vector<16x128xf32>
      %36 = vector.shape_cast %35 : vector<16x128xf32> to vector<2x8x128xf32>
      %cst_15 = arith.constant dense<0.000000e+00> : vector<8x128xf32>
      %37 = vector.multi_reduction <add>, %36, %cst_15 [0] : vector<2x8x128xf32> to vector<8x128xf32>
      %38 = arith.addf %17, %37 : vector<8x128xf32>
      %c1_i32_16 = arith.constant 1 : i32
      %39 = arith.addf %16, %38 : vector<8x128xf32>
      %c0_17 = arith.constant 0 : index
      %c0_18 = arith.constant 0 : index
      %40 = vector.load %arg5[%c0_17, %c0_18] : memref<8x128xf32, #tpu.memory_space<vmem>>, vector<8x128xf32>
      tpu.vector_store %arg5[%c0_17, %c0_18], %39 {strides = array<i32>} : memref<8x128xf32, #tpu.memory_space<vmem>>, vector<8x128xf32>,
    } else {
    }
    %c0_i32_5 = arith.constant 0 : i32
    %13 = arith.cmpi eq, %arg1, %c0_i32_5 : i32
    %14 = arith.extui %13 : i1 to i32
    %c0_i32_6 = arith.constant 0 : i32
    %15 = arith.cmpi ne, %14, %c0_i32_6 : i32
    scf.if %15 {
      %c0 = arith.constant 0 : index
      %c0_7 = arith.constant 0 : index
      %16 = vector.load %arg5[%c0, %c0_7] : memref<8x128xf32, #tpu.memory_space<vmem>>, vector<8x128xf32>
      %c0_8 = arith.constant 0 : index
      %c0_9 = arith.constant 0 : index
      %17 = vector.load %arg4[%c0_8, %c0_9] : memref<8x128xf32, #tpu.memory_space<vmem>>, vector<8x128xf32>
      tpu.vector_store %arg4[%c0_8, %c0_9], %16 {strides = array<i32>} : memref<8x128xf32, #tpu.memory_space<vmem>>, vector<8x128xf32>,
    } else {
    }
    return
  }
  func.func @transform_0(%arg0: i32, %arg1: i32) -> (i32, i32) {
    %c0_i32 = arith.constant 0 : i32
    %c0_i32_0 = arith.constant 0 : i32
    return %arg1, %c0_i32 : i32, i32
  }
  func.func @transform_1(%arg0: i32, %arg1: i32) -> (i32, i32) {
    %c0_i32 = arith.constant 0 : i32
    %c0_i32_0 = arith.constant 0 : i32
    return %arg1, %c0_i32 : i32, i32
  }
  func.func @transform_2(%arg0: i32, %arg1: i32) -> (i32, i32) {
    %c0_i32 = arith.constant 0 : i32
    %c0_i32_0 = arith.constant 0 : i32
    return %arg0, %c0_i32 : i32, i32
  }
}

</mosaic_0001>

<llo_original>
// kernel: tpu_custom_call.1
$region0: #{tpu_custom_call.1}
  #allocation0 [shape = 'u32[]', space=smem, size = 0x4, offset = 0x4, fixed_abs, tag = 'smem constant byte address 0x4 - core index']
  #allocation1 [shape = 'u32[144,128]{1,0:T(1,128)}', space=vmem, size = 0x12000, scoped, tag = 'internal scratch']
  #allocation2 [shape = 'f32[8,128]{1,0:T(8,128)}', space=vmem, size = 0x1000, scoped, tag = 'scratch operand']
  %s0 = inlined_call_operand.hbm [shape: f32[16,128], index: 0, kind: input, shape index: {}]
  %s1 = inlined_call_operand.hbm [shape: f32[16,128], index: 1, kind: input, shape index: {}]
  %s2 = inlined_call_operand.hbm [shape: f32[8,128], index: 2, kind: output, shape index: {}]
  %s3 = sld [smem:[#allocation0]]
  $region42: #{tpu_custom_call.1} parent=0
    _
  %s5 = ssub.s32 1, %s3
  %s6 = scalar_select 0, %s5, %s3
  $region1: #{tpu_custom_call.1} parent=0
    #allocation3 [shape = 'u8[8192]{0}', space=vmem, size = 0x2000, scoped, tag = 'input window, operand 0, single buffered']
    #allocation4 [shape = 's32[1]{0}', space=sflag, size = 0x4, scoped, tag = 'scoped memory for tpu_custom_call.1']
    #allocation5 [shape = 's32[1]{0}', space=sflag, size = 0x4, scoped, tag = 'scoped memory for tpu_custom_call.1']
    #allocation6 [shape = 'u8[8192]{0}', space=vmem, size = 0x2000, scoped, tag = 'input window, operand 1, single buffered']
    #allocation7 [shape = 's32[1]{0}', space=sflag, size = 0x4, scoped, tag = 'scoped memory for tpu_custom_call.1']
    #allocation8 [shape = 'u8[4096]{0}', space=vmem, size = 0x1000, scoped, tag = 'output window, operand 0, single buffered']
    %7 = vsyncpa [#allocation4], 0
    %8 = vsyncpa [#allocation7], 0
    %9 = vsyncpa [#allocation5], 0
    // Predicated region
    $region2: #{tpu_custom_call.1} parent=1 // pred_check
      _
    $region3: #{tpu_custom_call.1} parent=1 // pred_check_branch
      %11 = sbr.rel (0) target = $region5
    $region4: #{tpu_custom_call.1} parent=1 // pred_region
      %s13 = ssub.s32 256, 256
      %14 = vsyncadd [#allocation4], %s13
      %s15 = sshll.u32 [#allocation3], 4
      %s16 = int_to_ptr.vmem [resolvable:$true] %s15
      %21 = dma.hbm_to_vmem [thread:$0]  %s0, 256, %s16, [#allocation4], 128, 128, 8
    $region5: #{tpu_custom_call.1} parent=1 // pred_fallthru
      _
    // Predicated region
    $region6: #{tpu_custom_call.1} parent=1 // pred_check
      _
    $region7: #{tpu_custom_call.1} parent=1 // pred_check_branch
      %23 = sbr.rel (0) target = $region9
    $region8: #{tpu_custom_call.1} parent=1 // pred_region
      %s25 = ssub.s32 256, 256
      %26 = vsyncadd [#allocation7], %s25
      %s27 = sshll.u32 [#allocation6], 4
      %s28 = int_to_ptr.vmem [resolvable:$true] %s27
      %33 = dma.hbm_to_vmem [thread:$0]  %s1, 256, %s28, [#allocation7], 128, 128, 8
    $region9: #{tpu_custom_call.1} parent=1 // pred_fallthru
      _
    // Predicated region
    $region10: #{tpu_custom_call.1} parent=1 // pred_check
      _
    $region11: #{tpu_custom_call.1} parent=1 // pred_check_branch
      %35 = sbr.rel (0) target = $region13
    $region12: #{tpu_custom_call.1} parent=1 // pred_region
      %36 = dma.done [#allocation4], 256
    $region13: #{tpu_custom_call.1} parent=1 // pred_fallthru
      _
    // Predicated region
    $region14: #{tpu_custom_call.1} parent=1 // pred_check
      _
    $region15: #{tpu_custom_call.1} parent=1 // pred_check_branch
      %38 = sbr.rel (0) target = $region17
    $region16: #{tpu_custom_call.1} parent=1 // pred_region
      %39 = dma.done [#allocation7], 256
    $region17: #{tpu_custom_call.1} parent=1 // pred_fallthru
      _
    %p40 = scmp.eq.s32.totalorder 0, 0
    // Predicated region
    $region18: #{tpu_custom_call.1} parent=1 // pred_check
      %p41 = pneg %p40
    $region19: #{tpu_custom_call.1} parent=1 // pred_check_branch
      %43 = sbr.rel (%p41) target = $region21
    $region20: #{tpu_custom_call.1} parent=1 // pred_region
      %44 = vst [vmem:[#allocation2] sm:$0xff] 0.0
    $region21: #{tpu_custom_call.1} parent=1 // pred_fallthru
      _
    %s45 = sadd.s32 0, 0
    %s46 = smul.u32 %s45, 16
    %s47 = sadd.s32 %s46, 16
    %p48 = scmp.le.s32.totalorder %s47, 16
    // Predicated region
    $region22: #{tpu_custom_call.1} parent=1 // pred_check
      %p49 = pneg %p48
    $region23: #{tpu_custom_call.1} parent=1 // pred_check_branch
      %51 = sbr.rel (%p49) target = $region25
    $region24: #{tpu_custom_call.1} parent=1 // pred_region
      %v52 = vld [vmem:[#allocation2] sm:$0xff]
      %v53 = vld [vmem:[#allocation3] sm:$0xff]
      %v54 = vld [vmem:[#allocation3 + $0x8] sm:$0xff]
      %v55 = vld [vmem:[#allocation6] sm:$0xff]
      %v56 = vld [vmem:[#allocation6 + $0x8] sm:$0xff]
      %v57 = vsub.f32 %v53, %v55
      %v58 = vsub.f32 %v54, %v56
      %v59 = vsub.f32 %v57, 1.0
      %v60 = vsub.f32 %v58, 1.0
      %v61 = vmul.f32 %v59, %v59
      %v62 = vmul.f32 %v60, %v60
      %v63 = vadd.f32 %v61, %v62
      %v64 = vadd.f32 %v63, 0.0
      %v65 = vadd.f32 %v52, %v64
      %66 = vst [vmem:[#allocation2] sm:$0xff] %v65
    $region25: #{tpu_custom_call.1} parent=1 // pred_fallthru
      _
    %p67 = scmp.gt.s32.totalorder %s47, 16
    // Predicated region
    $region26: #{tpu_custom_call.1} parent=1 // pred_check
      %p68 = pneg %p67
    $region27: #{tpu_custom_call.1} parent=1 // pred_check_branch
      %70 = sbr.rel (%p68) target = $region29
    $region28: #{tpu_custom_call.1} parent=1 // pred_region
      %v71 = vld [vmem:[#allocation2] sm:$0xff]
      %v72 = vld [vmem:[#allocation3] sm:$0xff]
      %v73 = vld [vmem:[#allocation3 + $0x8] sm:$0xff]
      %v74 = vld [vmem:[#allocation6] sm:$0xff]
      %v75 = vld [vmem:[#allocation6 + $0x8] sm:$0xff]
      %v76 = vsub.f32 %v72, %v74
      %v77 = vsub.f32 %v73, %v75
      %v78 = vsub.f32 %v76, 1.0
      %v79 = vsub.f32 %v77, 1.0
      %v80 = vlaneseq
      %v81 = vshrl.u32 %v80, 7
      %v82 = vadd.s32 %v81, 8
      %s83 = sadd.s32 %s46, 0
      %v84 = vstv %s83
      %v85 = vadd.s32 %v84, %v81
      %v86 = vadd.s32 %v84, %v82
      %vm87 = vcmp.lt.s32.totalorder %v85, 16
      %vm88 = vcmp.lt.s32.totalorder %v86, 16
      %v89 = vsel %vm87, %v78, 0.0
      %v90 = vsel %vm88, %v79, 0.0
      %v91 = vmul.f32 %v89, %v89
      %v92 = vmul.f32 %v90, %v90
      %v93 = vadd.f32 %v91, %v92
      %v94 = vadd.f32 %v93, 0.0
      %v95 = vadd.f32 %v71, %v94
      %96 = vst [vmem:[#allocation2] sm:$0xff] %v95
    $region29: #{tpu_custom_call.1} parent=1 // pred_fallthru
      _
    // Predicated region
    $region30: #{tpu_custom_call.1} parent=1 // pred_check
      %p97 = pneg %p40
    $region31: #{tpu_custom_call.1} parent=1 // pred_check_branch
      %99 = sbr.rel (%p97) target = $region33
    $region32: #{tpu_custom_call.1} parent=1 // pred_region
      %v100 = vld [vmem:[#allocation2] sm:$0xff]
      %101 = vst [vmem:[#allocation8] sm:$0xff] %v100
    $region33: #{tpu_custom_call.1} parent=1 // pred_fallthru
      _
    // Predicated region
    $region34: #{tpu_custom_call.1} parent=1 // pred_check
      _
    $region35: #{tpu_custom_call.1} parent=1 // pred_check_branch
      %103 = sbr.rel (0) target = $region37
    $region36: #{tpu_custom_call.1} parent=1 // pred_region
      %s105 = ssub.s32 128, 128
      %106 = vsyncadd [#allocation5], %s105
      %s108 = sshll.u32 [#allocation8], 4
      %s109 = int_to_ptr.vmem [resolvable:$true] %s108
      %111 = dma.vmem_to_hbm [thread:$0]  %s109, 128, %s2, [#allocation5]
    $region37: #{tpu_custom_call.1} parent=1 // pred_fallthru
      _
    // Predicated region
    $region38: #{tpu_custom_call.1} parent=1 // pred_check
      _
    $region39: #{tpu_custom_call.1} parent=1 // pred_check_branch
      %113 = sbr.rel (0) target = $region41
    $region40: #{tpu_custom_call.1} parent=1 // pred_region
      %114 = dma.done [#allocation5], 128
    $region41: #{tpu_custom_call.1} parent=1 // pred_fallthru
      _
    %115 = vsyncpa [#allocation4], 1
    %116 = vsyncpa [#allocation7], 1
    %117 = vsyncpa [#allocation5], 1

</llo_original>
